<compile_context>
chip_gen: v5e
topology: v5e:2x2
jax: 0.10.0
libtpu: 0.0.40
codegen_flags: <defaults>
</compile_context>

<pallas_src>
import jax
import jax.numpy as jnp
from jax.experimental import pallas as pl
from jax.experimental.pallas import tpu as pltpu


def _round_up(a: int, b: int) -> int:
    return (a + b - 1) // b * b


# ---------------------------------------------------------------------------
# Small-problem kernel: one grid step over the whole (B, N, N) batch.
# ---------------------------------------------------------------------------
def _make_small_kernel(compute_dtype, swap_order):
    def kernel(x_ref, adj_ref, w_ref, b_ref, o_ref):
        # x_ref: (B, N, Cin); adj_ref: (B, N, N); w_ref: (Cin, Cout_p);
        # b_ref: (1, Cout_p); o_ref: (B, N, Cout_p)
        x = x_ref[...].astype(compute_dtype)
        adj = adj_ref[...].astype(compute_dtype)
        w = w_ref[...].astype(compute_dtype)
        if swap_order:
            # (adj @ x) @ W -- N x N contraction hits the narrow Cin dim.
            xa = jnp.einsum("bmk,bkc->bmc", adj, x,
                            preferred_element_type=jnp.float32)
            out = jnp.einsum("bmc,co->bmo", xa.astype(compute_dtype), w,
                             preferred_element_type=jnp.float32)
        else:
            # adj @ (x @ W) -- better when Cout < Cin.
            support = jnp.einsum("bkc,co->bko", x, w,
                                 preferred_element_type=jnp.float32)
            out = jnp.einsum("bmk,bko->bmo", adj,
                             support.astype(compute_dtype),
                             preferred_element_type=jnp.float32)
        o_ref[...] = (out + b_ref[...]).astype(o_ref.dtype)

    return kernel


# ---------------------------------------------------------------------------
# Tiled kernel: grid (B, N/tn, N/tn), f32 accumulator over the k axis;
# weight + bias applied and lane-dense store on the last k step.
# Order (adj @ x) @ W -- optimal for the common Cin <= Cout (expansion) case.
# ---------------------------------------------------------------------------
def _make_tiled_kernel(compute_dtype):
    def kernel(x_ref, adj_ref, w_ref, b_ref, o_ref, acc_ref):
        # x_ref:   (1, tn, Cin)     block (b, k, 0)
        # adj_ref: (1, tn, tn)      block (b, m, k)
        # w_ref:   (Cin, Cout_p)    resident
        # b_ref:   (1, Cout_p)      resident
        # o_ref:   (1, tn, Cout_p)  block (b, m, 0)
        # acc_ref: (tn, Cin) f32 scratch -- running (adj @ x) row tile
        k = pl.program_id(2)

        @pl.when(k == 0)
        def _():
            acc_ref[...] = jnp.zeros_like(acc_ref)

        a = adj_ref[0].astype(compute_dtype)
        xk = x_ref[0].astype(compute_dtype)
        acc_ref[...] += jnp.dot(a, xk, preferred_element_type=jnp.float32)

        @pl.when(k == pl.num_programs(2) - 1)
        def _():
            w = w_ref[...].astype(compute_dtype)
            out = jnp.dot(acc_ref[...].astype(compute_dtype), w,
                          preferred_element_type=jnp.float32)
            o_ref[0] = (out + b_ref[...]).astype(o_ref.dtype)

    return kernel


def gcn_forward(x, adj, weight, bias, *, block_n=512, use_bf16_mxu=False):
    """x: (B, N, Cin), adj: (B, N, N), weight: (Cin, Cout), bias: (Cout,)."""
    B, N, Cin = x.shape
    Cout = weight.shape[1]
    assert weight.shape[0] == Cin
    assert adj.shape == (B, N, N)
    assert bias.shape == (Cout,)

    out_dtype = x.dtype
    compute_dtype = jnp.bfloat16 if use_bf16_mxu else jnp.float32

    # Lane-dense output: pad the output feature dim up to a multiple of 128.
    Cout_p = _round_up(Cout, 128)
    w_p = weight if Cout_p == Cout else jnp.pad(weight, ((0, 0), (0, Cout_p - Cout)))
    b_p = bias if Cout_p == Cout else jnp.pad(bias, (0, Cout_p - Cout))
    b_p = b_p.reshape(1, Cout_p).astype(jnp.float32)

    if use_bf16_mxu:
        # Also halves adj/x HBM traffic (adj dominates: N^2 bytes per batch).
        x = x.astype(jnp.bfloat16)
        adj = adj.astype(jnp.bfloat16)
        w_p = w_p.astype(jnp.bfloat16)

    itemsize = x.dtype.itemsize
    out_itemsize = jnp.zeros((), out_dtype).dtype.itemsize

    # ------------------------- tiny-problem path --------------------------
    small = (N <= 256) and (B * N * N * itemsize <= (8 << 20))
    if small:
        swap_order = Cin <= Cout
        c_inner = Cin if swap_order else Cout_p
        flops = 2 * B * N * N * c_inner + 2 * B * N * Cin * Cout_p
        bytes_accessed = (
            (B * N * Cin + B * N * N) * itemsize
            + Cin * Cout_p * w_p.dtype.itemsize
            + Cout_p * 4
            + B * N * Cout_p * out_itemsize
        )
        out_p = pl.pallas_call(
            _make_small_kernel(compute_dtype, swap_order),
            out_shape=jax.ShapeDtypeStruct((B, N, Cout_p), out_dtype),
            grid_spec=pltpu.PrefetchScalarGridSpec(
                num_scalar_prefetch=0,
                grid=(1,),
                in_specs=[
                    pl.BlockSpec((B, N, Cin), lambda i: (0, 0, 0)),
                    pl.BlockSpec((B, N, N), lambda i: (0, 0, 0)),
                    pl.BlockSpec((Cin, Cout_p), lambda i: (0, 0)),
                    pl.BlockSpec((1, Cout_p), lambda i: (0, 0)),
                ],
                out_specs=pl.BlockSpec((B, N, Cout_p), lambda i: (0, 0, 0)),
            ),
            compiler_params=pltpu.CompilerParams(
                dimension_semantics=("arbitrary",),
                vmem_limit_bytes=48 * 1024 * 1024,
            ),
            cost_estimate=pl.CostEstimate(
                flops=flops, transcendentals=0, bytes_accessed=bytes_accessed),
        )(x, adj, w_p, b_p)
        return out_p[:, :, :Cout]

    # --------------------------- tiled path --------------------------------
    # tn is a multiple of 128 so (8, 128) block constraints hold; N is zero-
    # padded up to a multiple of tn (zero adj rows/cols contribute nothing,
    # padded output rows are sliced off).
    tn = min(_round_up(block_n, 128), _round_up(N, 128))
    N_p = _round_up(N, tn)
    if N_p != N:
        x = jnp.pad(x, ((0, 0), (0, N_p - N), (0, 0)))
        adj = jnp.pad(adj, ((0, 0), (0, N_p - N), (0, N_p - N)))

    num_m = N_p // tn
    num_k = N_p // tn
    flops = 2 * B * N_p * N_p * Cin + 2 * B * N_p * Cin * Cout_p
    bytes_accessed = (
        B * N_p * N_p * itemsize                 # adj read once
        + num_m * B * N_p * Cin * itemsize       # x re-streamed per row tile
        + Cin * Cout_p * w_p.dtype.itemsize
        + Cout_p * 4
        + B * N_p * Cout_p * out_itemsize
    )

    out_p = pl.pallas_call(
        _make_tiled_kernel(compute_dtype),
        out_shape=jax.ShapeDtypeStruct((B, N_p, Cout_p), out_dtype),
        grid_spec=pltpu.PrefetchScalarGridSpec(
            num_scalar_prefetch=0,
            grid=(B, num_m, num_k),
            in_specs=[
                pl.BlockSpec((1, tn, Cin), lambda b, m, k: (b, k, 0)),
                pl.BlockSpec((1, tn, tn), lambda b, m, k: (b, m, k)),
                pl.BlockSpec((Cin, Cout_p), lambda b, m, k: (0, 0)),
                pl.BlockSpec((1, Cout_p), lambda b, m, k: (0, 0)),
            ],
            out_specs=pl.BlockSpec((1, tn, Cout_p), lambda b, m, k: (b, m, 0)),
            scratch_shapes=[pltpu.VMEM((tn, Cin), jnp.float32)],
        ),
        compiler_params=pltpu.CompilerParams(
            dimension_semantics=("parallel", "parallel", "arbitrary"),
            vmem_limit_bytes=48 * 1024 * 1024,
        ),
        cost_estimate=pl.CostEstimate(
            flops=flops, transcendentals=0, bytes_accessed=bytes_accessed),
    )(x, adj, w_p, b_p)
    return out_p[:, :N, :Cout]


def gcn_reference(x, adj, weight, bias):
    # Pure-JAX reference mirroring the PyTorch loop.
    support = jnp.einsum("bni,io->bno", x, weight)
    out = jnp.einsum("bnm,bmo->bno", adj, support)
    return out + bias


if __name__ == "__main__":
    key = jax.random.PRNGKey(0)
    kx, ka, kw, kb = jax.random.split(key, 4)

    # ---- tiny shape from the original module test (single-step path) ----
    B, N, Cin, Cout = 2, 16, 8, 32
    x = jax.random.normal(kx, (B, N, Cin), dtype=jnp.float32)
    adj = jax.random.normal(ka, (B, N, N), dtype=jnp.float32)
    # Deterministic synthetic parameters (module __init__ leaves them
    # uninitialized; we just need deterministic values of the right shapes).
    weight = jax.random.normal(kw, (Cin, Cout), dtype=jnp.float32) * 0.1
    bias = jax.random.normal(kb, (Cout,), dtype=jnp.float32) * 0.1

    out = jax.block_until_ready(gcn_forward(x, adj, weight, bias))
    ref = gcn_reference(x, adj, weight, bias)
    assert out.shape == (B, N, Cout)
    assert jnp.allclose(out, ref, atol=1e-4, rtol=1e-4)

    # bf16 MXU fast path (f32 accumulation) -- looser tolerance.
    out_bf16 = jax.block_until_ready(
        gcn_forward(x, adj, weight, bias, use_bf16_mxu=True))
    assert out_bf16.shape == (B, N, Cout)
    assert jnp.allclose(out_bf16, ref, atol=5e-2, rtol=5e-2)

    # ---- larger N exercising the tiled / accumulating path (with padding) ----
    B2, N2 = 2, 300
    kx2, ka2 = jax.random.split(kx)
    x2 = jax.random.normal(kx2, (B2, N2, Cin), dtype=jnp.float32)
    adj2 = jax.random.normal(ka2, (B2, N2, N2), dtype=jnp.float32)
    out2 = jax.block_until_ready(
        gcn_forward(x2, adj2, weight, bias, block_n=128))
    ref2 = gcn_reference(x2, adj2, weight, bias)
    assert out2.shape == (B2, N2, Cout)
    assert jnp.allclose(out2, ref2, atol=1e-3, rtol=1e-3)

    print("KERNEL_OK")
</pallas_src>

<mosaic_0001>
module attributes {stable_mosaic.version = 11 : i64} {
  func.func @kernel(%arg0: i32, %arg1: memref<2x16x8xf32, #tpu.memory_space<vmem>>, %arg2: memref<2x16x16xf32, #tpu.memory_space<vmem>>, %arg3: memref<8x128xf32, #tpu.memory_space<vmem>>, %arg4: memref<1x128xf32, #tpu.memory_space<vmem>>, %arg5: memref<2x16x128xf32, #tpu.memory_space<vmem>>) attributes {dimension_semantics = [#tpu.dimension_semantics<arbitrary>], iteration_bounds = array<i64: 1>, scalar_prefetch = 0 : i64, scratch_operands = 0 : i64, tpu.core_type = #tpu.core_type<tc>, window_params = [{pipeline_mode = #tpu.pipeline_mode<synchronous>, transform_indices = @transform_0, window_bounds = array<i64: 2, 16, 8>}, {pipeline_mode = #tpu.pipeline_mode<synchronous>, transform_indices = @transform_1, window_bounds = array<i64: 2, 16, 16>}, {pipeline_mode = #tpu.pipeline_mode<synchronous>, transform_indices = @transform_2, window_bounds = array<i64: 8, 128>}, {pipeline_mode = #tpu.pipeline_mode<synchronous>, transform_indices = @transform_3, window_bounds = array<i64: 1, 128>}, {pipeline_mode = #tpu.pipeline_mode<synchronous>, transform_indices = @transform_4, window_bounds = array<i64: 2, 16, 128>}]} {
    %c0 = arith.constant 0 : index
    %c0_0 = arith.constant 0 : index
    %c0_1 = arith.constant 0 : index
    %0 = vector.load %arg1[%c0, %c0_0, %c0_1] : memref<2x16x8xf32, #tpu.memory_space<vmem>>, vector<2x16x8xf32>
    %c0_2 = arith.constant 0 : index
    %c0_3 = arith.constant 0 : index
    %c0_4 = arith.constant 0 : index
    %1 = vector.load %arg2[%c0_2, %c0_3, %c0_4] : memref<2x16x16xf32, #tpu.memory_space<vmem>>, vector<2x16x16xf32>
    %c0_5 = arith.constant 0 : index
    %c0_6 = arith.constant 0 : index
    %2 = vector.load %arg3[%c0_5, %c0_6] : memref<8x128xf32, #tpu.memory_space<vmem>>, vector<8x128xf32>
    "tpu.trace_start"() <{level = 10 : i32, message = "bmk,bkc->bmc"}> : () -> ()
    %cst = arith.constant dense<0.000000e+00> : vector<2x16x8xf32>
    %3 = tpu.matmul %1, %0, %cst {dimension_numbers = #tpu.dot_dimension_numbers<[2], [1], [1], [2], [0, 0, 0, 1, 1, 2], [0], [0]>} : vector<2x16x16xf32>, vector<2x16x8xf32>, vector<2x16x8xf32> -> vector<2x16x8xf32>
    "tpu.trace_stop"() : () -> ()
    "tpu.trace_start"() <{level = 10 : i32, message = "bmc,co->bmo"}> : () -> ()
    %cst_7 = arith.constant dense<0.000000e+00> : vector<2x16x128xf32>
    %4 = tpu.matmul %3, %2, %cst_7 {dimension_numbers = #tpu.dot_dimension_numbers<[2], [0], [0, 1], [1], [0, 0, 0, 1, 1, 1], [], []>} : vector<2x16x8xf32>, vector<8x128xf32>, vector<2x16x128xf32> -> vector<2x16x128xf32>
    "tpu.trace_stop"() : () -> ()
    %c0_8 = arith.constant 0 : index
    %c0_9 = arith.constant 0 : index
    %5 = vector.load %arg4[%c0_8, %c0_9] : memref<1x128xf32, #tpu.memory_space<vmem>>, vector<1x128xf32>
    %6 = vector.shape_cast %5 : vector<1x128xf32> to vector<1x1x128xf32>
    %7 = vector.broadcast %6 : vector<1x1x128xf32> to vector<2x16x128xf32>
    %8 = arith.addf %4, %7 : vector<2x16x128xf32>
    %c0_10 = arith.constant 0 : index
    %c0_11 = arith.constant 0 : index
    %c0_12 = arith.constant 0 : index
    %9 = vector.load %arg5[%c0_10, %c0_11, %c0_12] : memref<2x16x128xf32, #tpu.memory_space<vmem>>, vector<2x16x128xf32>
    tpu.vector_store %arg5[%c0_10, %c0_11, %c0_12], %8 {strides = array<i32>} : memref<2x16x128xf32, #tpu.memory_space<vmem>>, vector<2x16x128xf32>,
    return
  }
  func.func @transform_0(%arg0: i32) -> (i32, i32, i32) {
    %c0_i32 = arith.constant 0 : i32
    %c0_i32_0 = arith.constant 0 : i32
    %c0_i32_1 = arith.constant 0 : i32
    %c0_i32_2 = arith.constant 0 : i32
    return %c0_i32, %c0_i32_0, %c0_i32_1 : i32, i32, i32
  }
  func.func @transform_1(%arg0: i32) -> (i32, i32, i32) {
    %c0_i32 = arith.constant 0 : i32
    %c0_i32_0 = arith.constant 0 : i32
    %c0_i32_1 = arith.constant 0 : i32
    %c0_i32_2 = arith.constant 0 : i32
    return %c0_i32, %c0_i32_0, %c0_i32_1 : i32, i32, i32
  }
  func.func @transform_2(%arg0: i32) -> (i32, i32) {
    %c0_i32 = arith.constant 0 : i32
    %c0_i32_0 = arith.constant 0 : i32
    %c0_i32_1 = arith.constant 0 : i32
    return %c0_i32, %c0_i32_0 : i32, i32
  }
  func.func @transform_3(%arg0: i32) -> (i32, i32) {
    %c0_i32 = arith.constant 0 : i32
    %c0_i32_0 = arith.constant 0 : i32
    %c0_i32_1 = arith.constant 0 : i32
    return %c0_i32, %c0_i32_0 : i32, i32
  }
  func.func @transform_4(%arg0: i32) -> (i32, i32, i32) {
    %c0_i32 = arith.constant 0 : i32
    %c0_i32_0 = arith.constant 0 : i32
    %c0_i32_1 = arith.constant 0 : i32
    %c0_i32_2 = arith.constant 0 : i32
    return %c0_i32, %c0_i32_0, %c0_i32_1 : i32, i32, i32
  }
}

</mosaic_0001>

<llo_original>
// kernel: tpu_custom_call.1
$region0: #{tpu_custom_call.1}
  #allocation0 [shape = 'u32[]', space=smem, size = 0x4, offset = 0x4, fixed_abs, tag = 'smem constant byte address 0x4 - core index']
  #allocation1 [shape = 'u32[72,128]{1,0:T(1,128)}', space=vmem, size = 0x9000, scoped, tag = 'internal scratch']
  %s0 = inlined_call_operand.vmem [shape: f32[2,16,8], index: 0, kind: input, shape index: {}]
  %s1 = inlined_call_operand.vmem [shape: f32[2,16,16], index: 1, kind: input, shape index: {}]
  %s2 = inlined_call_operand.vmem [shape: f32[8,128], index: 2, kind: input, shape index: {}]
  %s3 = inlined_call_operand.vmem [shape: f32[1,128], index: 3, kind: input, shape index: {}]
  %s4 = inlined_call_operand.hbm [shape: f32[2,16,128], index: 4, kind: output, shape index: {}]
  %s5 = sld [smem:[#allocation0]]
  $region26: #{tpu_custom_call.1} parent=0
    _
  %s7 = ssub.s32 1, %s5
  %s8 = scalar_select 0, %s7, %s5
  $region1: #{tpu_custom_call.1} parent=0
    #allocation2 [shape = 'u8[16384]{0}', space=vmem, size = 0x4000, scoped, tag = 'output window, operand 0, single buffered']
    #allocation3 [shape = 's32[1]{0}', space=sflag, size = 0x4, scoped, tag = 'scoped memory for tpu_custom_call.1']
    %9 = vsyncpa [#allocation3], 0
    // Predicated region
    $region2: #{tpu_custom_call.1} parent=1 // pred_check
      _
    $region3: #{tpu_custom_call.1} parent=1 // pred_check_branch
      %11 = sbr.rel (0) target = $region5
    $region4: #{tpu_custom_call.1} parent=1 // pred_region
      _
    $region5: #{tpu_custom_call.1} parent=1 // pred_fallthru
      _
    // Predicated region
    $region6: #{tpu_custom_call.1} parent=1 // pred_check
      _
    $region7: #{tpu_custom_call.1} parent=1 // pred_check_branch
      %13 = sbr.rel (0) target = $region9
    $region8: #{tpu_custom_call.1} parent=1 // pred_region
      _
    $region9: #{tpu_custom_call.1} parent=1 // pred_fallthru
      _
    // Predicated region
    $region10: #{tpu_custom_call.1} parent=1 // pred_check
      _
    $region11: #{tpu_custom_call.1} parent=1 // pred_check_branch
      %15 = sbr.rel (0) target = $region13
    $region12: #{tpu_custom_call.1} parent=1 // pred_region
      _
    $region13: #{tpu_custom_call.1} parent=1 // pred_fallthru
      _
    // Predicated region
    $region14: #{tpu_custom_call.1} parent=1 // pred_check
      _
    $region15: #{tpu_custom_call.1} parent=1 // pred_check_branch
      %17 = sbr.rel (0) target = $region17
    $region16: #{tpu_custom_call.1} parent=1 // pred_region
      _
    $region17: #{tpu_custom_call.1} parent=1 // pred_fallthru
      _
    %v18 = vld [vmem:[%s0] sm:$0xff]
    %v19 = vld [vmem:[%s0 + $0x8] sm:$0xff]
    %v20 = vld [vmem:[%s0 + $0x10] sm:$0xff]
    %v21 = vld [vmem:[%s0 + $0x18] sm:$0xff]
    %v22 = vld [vmem:[%s1] sm:$0xff]
    %v23 = vld [vmem:[%s1 + $0x8] sm:$0xff]
    %v24 = vld [vmem:[%s1 + $0x10] sm:$0xff]
    %v25 = vld [vmem:[%s1 + $0x18] sm:$0xff]
    %v26 = vld [vmem:[%s2] sm:$0xff]
    %vm27 = vcmask 130048
    %v29 = vsel %vm27, %v22, 0
    %v32 = vsel %vm27, %v23, 0
    %34 = vmatpush.msra.mxu0 0.0
    %35 = vmatpush.msra.mxu0 0.0
    %36 = vmatpush.msra.mxu0 0.0
    %37 = vmatpush.msra.mxu0 0.0
    %38 = vmatpush.msra.mxu0 0.0
    %39 = vmatpush.msra.mxu0 0.0
    %40 = vmatpush.msra.mxu0 0.0
    %41 = vmatpush.msra.mxu0 0.0
    %42 = vmatpush.msra.mxu0 0.0
    %43 = vmatpush.msra.mxu0 0.0
    %44 = vmatpush.msra.mxu0 0.0
    %45 = vmatpush.msra.mxu0 0.0
    %46 = vmatpush.msra.mxu0 0.0
    %47 = vmatpush.msra.mxu0 0.0
    %48 = vmatpush.msra.mxu0 %v19
    %49 = vmatpush.msra.mxu0 %v18
    %50 = vmatmul.f32.gmra.mxu0 %v29
    %v51 = vpop.f32.mrf.mxu0
    %v52 = vadd.f32 0.0, %v51
    %53 = vmatmul.f32.gmra.mxu0 %v32
    %v54 = vpop.f32.mrf.mxu0
    %v55 = vadd.f32 0.0, %v54
    %56 = vdwg.mxu0
    %v58 = vsel %vm27, %v24, 0
    %v61 = vsel %vm27, %v25, 0
    %63 = vmatpush.msra.mxu0 0.0
    %64 = vmatpush.msra.mxu0 0.0
    %65 = vmatpush.msra.mxu0 0.0
    %66 = vmatpush.msra.mxu0 0.0
    %67 = vmatpush.msra.mxu0 0.0
    %68 = vmatpush.msra.mxu0 0.0
    %69 = vmatpush.msra.mxu0 0.0
    %70 = vmatpush.msra.mxu0 0.0
    %71 = vmatpush.msra.mxu0 0.0
    %72 = vmatpush.msra.mxu0 0.0
    %73 = vmatpush.msra.mxu0 0.0
    %74 = vmatpush.msra.mxu0 0.0
    %75 = vmatpush.msra.mxu0 0.0
    %76 = vmatpush.msra.mxu0 0.0
    %77 = vmatpush.msra.mxu0 %v21
    %78 = vmatpush.msra.mxu0 %v20
    %79 = vmatmul.f32.gmra.mxu0 %v58
    %v80 = vpop.f32.mrf.mxu0
    %v81 = vadd.f32 0.0, %v80
    %82 = vmatmul.f32.gmra.mxu0 %v61
    %v83 = vpop.f32.mrf.mxu0
    %v84 = vadd.f32 0.0, %v83
    %85 = vdwg.mxu0
    %v86 = vld [vmem:[%s3] sm:$0x1]
    %v88 = vperm.slane %v86, 0
    %vm90 = vcmask 64512
    %v92 = vsel %vm90, %v52, 0
    %v95 = vsel %vm90, %v55, 0
    %v98 = vsel %vm90, %v81, 0
    %v101 = vsel %vm90, %v84, 0
    %103 = vmatpush.msra.mxu0 0.0
    %104 = vmatpush.msra.mxu0 0.0
    %105 = vmatpush.msra.mxu0 0.0
    %106 = vmatpush.msra.mxu0 0.0
    %107 = vmatpush.msra.mxu0 0.0
    %108 = vmatpush.msra.mxu0 0.0
    %109 = vmatpush.msra.mxu0 0.0
    %110 = vmatpush.msra.mxu0 0.0
    %111 = vmatpush.msra.mxu0 0.0
    %112 = vmatpush.msra.mxu0 0.0
    %113 = vmatpush.msra.mxu0 0.0
    %114 = vmatpush.msra.mxu0 0.0
    %115 = vmatpush.msra.mxu0 0.0
    %116 = vmatpush.msra.mxu0 0.0
    %117 = vmatpush.msra.mxu0 0.0
    %118 = vmatpush.msra.mxu0 %v26
    %119 = vmatmul.f32.gmra.mxu0 %v92
    %v120 = vpop.f32.mrf.mxu0
    %v121 = vadd.f32 %v88, %v120
    %122 = vmatmul.f32.gmra.mxu0 %v95
    %v123 = vpop.f32.mrf.mxu0
    %v124 = vadd.f32 %v88, %v123
    %125 = vmatmul.f32.gmra.mxu0 %v98
    %v126 = vpop.f32.mrf.mxu0
    %v127 = vadd.f32 %v88, %v126
    %128 = vmatmul.f32.gmra.mxu0 %v101
    %v129 = vpop.f32.mrf.mxu0
    %v130 = vadd.f32 %v88, %v129
    %131 = vdwg.mxu0
    %132 = vst [vmem:[#allocation2] sm:$0xff] %v121
    %133 = vst [vmem:[#allocation2 + $0x8] sm:$0xff] %v124
    %134 = vst [vmem:[#allocation2 + $0x10] sm:$0xff] %v127
    %135 = vst [vmem:[#allocation2 + $0x18] sm:$0xff] %v130
    // Predicated region
    $region18: #{tpu_custom_call.1} parent=1 // pred_check
      _
    $region19: #{tpu_custom_call.1} parent=1 // pred_check_branch
      %137 = sbr.rel (0) target = $region21
    $region20: #{tpu_custom_call.1} parent=1 // pred_region
      %139 = vsyncadd [#allocation3], 0
      %s140 = sshll.u32 [#allocation2], 4
      %s141 = int_to_ptr.vmem [resolvable:$true] %s140
      %s142 = sshll.u32 %s4, 4
      %s143 = int_to_ptr.hbm [resolvable:$true] %s142
      %148 = dma.vmem_to_hbm [thread:$0]  %s141, 512, %s143, [#allocation3], 128, 128, 8
    $region21: #{tpu_custom_call.1} parent=1 // pred_fallthru
      _
    // Predicated region
    $region22: #{tpu_custom_call.1} parent=1 // pred_check
      _
    $region23: #{tpu_custom_call.1} parent=1 // pred_check_branch
      %150 = sbr.rel (0) target = $region25
    $region24: #{tpu_custom_call.1} parent=1 // pred_region
      %152 = dma.done [#allocation3], 512
    $region25: #{tpu_custom_call.1} parent=1 // pred_fallthru
      _
    %153 = vsyncpa [#allocation3], 1

</llo_original>
